<compile_context>
chip_gen: v7x
topology: tpu7x:2x2x1
jax: 0.10.0
libtpu: 0.0.40
codegen_flags: <defaults>
</compile_context>

<pallas_src>
import functools

import jax
import jax.numpy as jnp
from jax.experimental import pallas as pl
from jax.experimental.pallas import tpu as pltpu


def _round_up(x: int, m: int) -> int:
    return ((x + m - 1) // m) * m


def mlp_block_kernel(x_ref, gamma_ref, beta_ref, w_in_ref, b_in_ref,
                     w_out_ref, b_out_ref, o_ref, acc_ref, normed_ref,
                     *, use_bf16_matmul: bool):
    # grid = (row_tiles, h_tiles); axis 1 is the reduction over the hidden dim.
    j = pl.program_id(1)

    @pl.when(j == 0)
    def _init():
        # ---- LayerNorm over channels (eps = 1e-5, torch default), cached across H steps.
        x = x_ref[...].astype(jnp.float32)
        mean = jnp.mean(x, axis=-1, keepdims=True)
        centered = x - mean
        var = jnp.mean(centered * centered, axis=-1, keepdims=True)
        inv_std = jax.lax.rsqrt(var + 1e-5)
        normed_ref[...] = centered * inv_std * gamma_ref[...] + beta_ref[...]
        acc_ref[...] = jnp.zeros_like(acc_ref)

    normed = normed_ref[...]
    w_in = w_in_ref[...]
    if use_bf16_matmul:
        normed = normed.astype(jnp.bfloat16)
        w_in = w_in.astype(jnp.bfloat16)

    # ---- lin_in slice: (tm, C) @ (C, th) + (th,)
    h = jnp.dot(normed, w_in, preferred_element_type=jnp.float32) + b_in_ref[...]

    # ---- GELU (exact, erf-based — matches torch.nn.GELU default)
    h = 0.5 * h * (1.0 + jax.lax.erf(h * 0.7071067811865476))

    w_out = w_out_ref[...]
    if use_bf16_matmul:
        h = h.astype(jnp.bfloat16)
        w_out = w_out.astype(jnp.bfloat16)

    # ---- lin_out partial sum over this H tile: (tm, th) @ (th, C)
    acc_ref[...] += jnp.dot(h, w_out, preferred_element_type=jnp.float32)

    @pl.when(j == pl.num_programs(1) - 1)
    def _finalize():
        y = acc_ref[...] + b_out_ref[...]
        o_ref[...] = (x_ref[...].astype(jnp.float32) + y).astype(o_ref.dtype)


def mlp_block(x, gamma, beta, w_in, b_in, w_out, b_out, *,
              tm=None, th=None, use_bf16_matmul=False,
              vmem_limit_bytes=48 * 1024 * 1024):
    """x: (rows, C).  w_in: (C, H), w_out: (H, C) (already transposed from torch layout)."""
    rows, C = x.shape
    C_w, H = w_in.shape
    assert C_w == C and w_out.shape == (H, C)

    # Row tile: big enough to fill the MXU M dim and amortize the ~0.35 us per-step
    # pipeline overhead (256 matches v6e/v7x's 256-wide MXU; use tm=128 on v5e), but
    # never larger than the padded problem so tiny inputs run as one grid step.
    if tm is None:
        tm = min(256, _round_up(rows, 8))
    tm = max(8, _round_up(tm, 8))

    # Hidden tile: stream weights over H when H is large so VMEM stays bounded
    # (w_in tile + w_out tile + activations) regardless of hidden size.  H tiles
    # must be lane-aligned (multiple of 128) unless they cover all of H.
    if th is None:
        th = H if H <= 2048 else 2048
    if th != H:
        th = _round_up(th, 128)

    rows_p = _round_up(rows, tm)
    H_p = _round_up(H, th)

    x_p = x
    if rows_p != rows:
        x_p = jnp.zeros((rows_p, C), x.dtype).at[:rows].set(x)
    if H_p != H:
        # Zero-padding the hidden dim is exact: gelu(0 + 0) = 0 and zero w_out rows
        # contribute nothing to the accumulator.
        w_in = jnp.zeros((C, H_p), w_in.dtype).at[:, :H].set(w_in)
        b_in = jnp.zeros((1, H_p), b_in.dtype).at[:, :H].set(b_in)
        w_out = jnp.zeros((H_p, C), w_out.dtype).at[:H, :].set(w_out)

    grid = (rows_p // tm, H_p // th)

    kernel = functools.partial(mlp_block_kernel, use_bf16_matmul=use_bf16_matmul)

    out = pl.pallas_call(
        kernel,
        out_shape=jax.ShapeDtypeStruct((rows_p, C), x.dtype),
        grid_spec=pltpu.PrefetchScalarGridSpec(
            num_scalar_prefetch=0,
            grid=grid,
            in_specs=[
                pl.BlockSpec((tm, C), lambda i, j: (i, 0)),   # x row tile (resident over j)
                pl.BlockSpec((1, C), lambda i, j: (0, 0)),    # gamma
                pl.BlockSpec((1, C), lambda i, j: (0, 0)),    # beta
                pl.BlockSpec((C, th), lambda i, j: (0, j)),   # W_in tile  (C, th)
                pl.BlockSpec((1, th), lambda i, j: (0, j)),   # b_in tile
                pl.BlockSpec((th, C), lambda i, j: (j, 0)),   # W_out tile (th, C)
                pl.BlockSpec((1, C), lambda i, j: (0, 0)),    # b_out
            ],
            # NOTE: lane-sparse when C < 128 (masked vst); see header comment.
            out_specs=pl.BlockSpec((tm, C), lambda i, j: (i, 0)),
            scratch_shapes=[
                pltpu.VMEM((tm, C), jnp.float32),   # lin_out accumulator
                pltpu.VMEM((tm, C), jnp.float32),   # cached LayerNorm output
            ],
        ),
        compiler_params=pltpu.CompilerParams(
            dimension_semantics=("parallel", "arbitrary"),
            vmem_limit_bytes=vmem_limit_bytes,
        ),
    )(x_p, gamma, beta, w_in, b_in, w_out, b_out)

    return out[:rows] if rows_p != rows else out


def reference_mlp_block(x, gamma, beta, w_in, b_in, w_out, b_out):
    mean = jnp.mean(x, axis=-1, keepdims=True)
    var = jnp.mean((x - mean) ** 2, axis=-1, keepdims=True)
    normed = (x - mean) * jax.lax.rsqrt(var + 1e-5) * gamma + beta
    h = normed @ w_in + b_in
    h = 0.5 * h * (1.0 + jax.lax.erf(h / jnp.sqrt(2.0)))
    y = h @ w_out + b_out
    return x + y


if __name__ == "__main__":
    # Module config: n_channels=32, n_mult=4 -> hidden=128.
    n_channels, n_mult = 32, 4
    hidden = n_channels * n_mult
    batch, seq = 2, 8

    key = jax.random.PRNGKey(0)
    kx, kwi, kbi, kwo, kbo = jax.random.split(key, 5)

    # Input: (batch, seq, n_channels) flattened to rows x channels.
    x3 = jax.random.normal(kx, (batch, seq, n_channels), dtype=jnp.float32)
    x = x3.reshape(batch * seq, n_channels)

    # LayerNorm params (torch default init: gamma=1, beta=0).
    gamma = jnp.ones((1, n_channels), jnp.float32)
    beta = jnp.zeros((1, n_channels), jnp.float32)

    # lin_in: torch Linear(n_channels, hidden) — uniform-ish init.
    bound_in = 1.0 / jnp.sqrt(n_channels)
    w_in_t = jax.random.uniform(kwi, (hidden, n_channels), jnp.float32,
                                -bound_in, bound_in)          # torch layout (out, in)
    b_in = jax.random.uniform(kbi, (1, hidden), jnp.float32, -bound_in, bound_in)

    # lin_out: Linear(hidden, n_channels) with weight ~ N(0, 1e-5).
    w_out_t = 1e-5 * jax.random.normal(kwo, (n_channels, hidden), jnp.float32)
    bound_out = 1.0 / jnp.sqrt(hidden)
    b_out = jax.random.uniform(kbo, (1, n_channels), jnp.float32,
                               -bound_out, bound_out)

    # Pre-transpose to matmul-friendly layout.
    w_in = w_in_t.T    # (C, H)
    w_out = w_out_t.T  # (H, C)

    # Case 1: toy config — tm auto-collapses so the whole problem is one grid step.
    out = mlp_block(x, gamma, beta, w_in, b_in, w_out, b_out)
    out = jax.block_until_ready(out)
    ref = reference_mlp_block(x, gamma, beta, w_in, b_in, w_out, b_out)
    assert out.shape == (batch * seq, n_channels)
    assert jnp.allclose(out, ref, atol=1e-4, rtol=1e-4), "mismatch vs reference (case 1)"

    # Case 2: rows not a multiple of the tile — exercises the zero-padding path and a
    # multi-step parallel row grid (megacore-shardable).
    rows2 = 150
    x2 = jax.random.normal(jax.random.PRNGKey(1), (rows2, n_channels), jnp.float32)
    out2 = jax.block_until_ready(
        mlp_block(x2, gamma, beta, w_in, b_in, w_out, b_out, tm=64))
    ref2 = reference_mlp_block(x2, gamma, beta, w_in, b_in, w_out, b_out)
    assert out2.shape == (rows2, n_channels)
    assert jnp.allclose(out2, ref2, atol=1e-4, rtol=1e-4), "mismatch vs reference (case 2)"

    # Restore original (batch, seq, channels) view if needed.
    _ = out.reshape(batch, seq, n_channels)
    print("KERNEL_OK")
</pallas_src>

<mosaic_0001>
module attributes {stable_mosaic.version = 11 : i64} {
  func.func @mlp_block_kernel(%arg0: i32, %arg1: i32, %arg2: memref<16x32xf32, #tpu.memory_space<vmem>>, %arg3: memref<1x32xf32, #tpu.memory_space<vmem>>, %arg4: memref<1x32xf32, #tpu.memory_space<vmem>>, %arg5: memref<32x128xf32, #tpu.memory_space<vmem>>, %arg6: memref<1x128xf32, #tpu.memory_space<vmem>>, %arg7: memref<128x32xf32, #tpu.memory_space<vmem>>, %arg8: memref<1x32xf32, #tpu.memory_space<vmem>>, %arg9: memref<16x32xf32, #tpu.memory_space<vmem>>, %arg10: memref<16x32xf32, #tpu.memory_space<vmem>>, %arg11: memref<16x32xf32, #tpu.memory_space<vmem>>) attributes {dimension_semantics = [#tpu.dimension_semantics<parallel>, #tpu.dimension_semantics<arbitrary>], iteration_bounds = array<i64: 1, 1>, scalar_prefetch = 0 : i64, scratch_operands = 2 : i64, tpu.core_type = #tpu.core_type<tc>, window_params = [{transform_indices = @transform_0, window_bounds = array<i64: 16, 32>}, {pipeline_mode = #tpu.pipeline_mode<synchronous>, transform_indices = @transform_1, window_bounds = array<i64: 1, 32>}, {pipeline_mode = #tpu.pipeline_mode<synchronous>, transform_indices = @transform_2, window_bounds = array<i64: 1, 32>}, {transform_indices = @transform_3, window_bounds = array<i64: 32, 128>}, {transform_indices = @transform_4, window_bounds = array<i64: 1, 128>}, {transform_indices = @transform_5, window_bounds = array<i64: 128, 32>}, {pipeline_mode = #tpu.pipeline_mode<synchronous>, transform_indices = @transform_6, window_bounds = array<i64: 1, 32>}, {transform_indices = @transform_7, window_bounds = array<i64: 16, 32>}]} {
    %c0_i32 = arith.constant 0 : i32
    %0 = arith.cmpi eq, %arg1, %c0_i32 : i32
    %1 = arith.extui %0 : i1 to i32
    %c0_i32_0 = arith.constant 0 : i32
    %2 = arith.cmpi ne, %1, %c0_i32_0 : i32
    scf.if %2 {
      %c0_18 = arith.constant 0 : index
      %c0_19 = arith.constant 0 : index
      %25 = vector.load %arg2[%c0_18, %c0_19] : memref<16x32xf32, #tpu.memory_space<vmem>>, vector<16x32xf32>
      %cst_20 = arith.constant dense<0.000000e+00> : vector<16xf32>
      %26 = vector.multi_reduction <add>, %25, %cst_20 [1] : vector<16x32xf32> to vector<16xf32>
      %27 = vector.shape_cast %26 : vector<16xf32> to vector<16x1xf32>
      %cst_21 = arith.constant 3.200000e+01 : f32
      %28 = vector.broadcast %cst_21 : f32 to vector<16x1xf32>
      %29 = arith.divf %27, %28 : vector<16x1xf32>
      %30 = vector.broadcast %29 : vector<16x1xf32> to vector<16x32xf32>
      %31 = arith.subf %25, %30 : vector<16x32xf32>
      %32 = arith.mulf %31, %31 : vector<16x32xf32>
      %cst_22 = arith.constant dense<0.000000e+00> : vector<16xf32>
      %33 = vector.multi_reduction <add>, %32, %cst_22 [1] : vector<16x32xf32> to vector<16xf32>
      %34 = vector.shape_cast %33 : vector<16xf32> to vector<16x1xf32>
      %cst_23 = arith.constant 3.200000e+01 : f32
      %35 = vector.broadcast %cst_23 : f32 to vector<16x1xf32>
      %36 = arith.divf %34, %35 : vector<16x1xf32>
      %cst_24 = arith.constant 9.99999974E-6 : f32
      %37 = vector.broadcast %cst_24 : f32 to vector<16x1xf32>
      %38 = arith.addf %36, %37 : vector<16x1xf32>
      %39 = math.rsqrt %38 : vector<16x1xf32>
      %40 = vector.broadcast %39 : vector<16x1xf32> to vector<16x32xf32>
      %41 = arith.mulf %31, %40 : vector<16x32xf32>
      %c0_25 = arith.constant 0 : index
      %c0_26 = arith.constant 0 : index
      %42 = vector.load %arg3[%c0_25, %c0_26] : memref<1x32xf32, #tpu.memory_space<vmem>>, vector<1x32xf32>
      %43 = vector.broadcast %42 : vector<1x32xf32> to vector<16x32xf32>
      %44 = arith.mulf %41, %43 : vector<16x32xf32>
      %c0_27 = arith.constant 0 : index
      %c0_28 = arith.constant 0 : index
      %45 = vector.load %arg4[%c0_27, %c0_28] : memref<1x32xf32, #tpu.memory_space<vmem>>, vector<1x32xf32>
      %46 = vector.broadcast %45 : vector<1x32xf32> to vector<16x32xf32>
      %47 = arith.addf %44, %46 : vector<16x32xf32>
      %c0_29 = arith.constant 0 : index
      %c0_30 = arith.constant 0 : index
      %48 = vector.load %arg11[%c0_29, %c0_30] : memref<16x32xf32, #tpu.memory_space<vmem>>, vector<16x32xf32>
      tpu.vector_store %arg11[%c0_29, %c0_30], %47 {strides = array<i32>} : memref<16x32xf32, #tpu.memory_space<vmem>>, vector<16x32xf32>,
      %cst_31 = arith.constant 0.000000e+00 : f32
      %49 = vector.broadcast %cst_31 : f32 to vector<16x32xf32>
      %c0_32 = arith.constant 0 : index
      %c0_33 = arith.constant 0 : index
      %50 = vector.load %arg10[%c0_32, %c0_33] : memref<16x32xf32, #tpu.memory_space<vmem>>, vector<16x32xf32>
      tpu.vector_store %arg10[%c0_32, %c0_33], %49 {strides = array<i32>} : memref<16x32xf32, #tpu.memory_space<vmem>>, vector<16x32xf32>,
    } else {
    }
    %c0 = arith.constant 0 : index
    %c0_1 = arith.constant 0 : index
    %3 = vector.load %arg11[%c0, %c0_1] : memref<16x32xf32, #tpu.memory_space<vmem>>, vector<16x32xf32>
    %c0_2 = arith.constant 0 : index
    %c0_3 = arith.constant 0 : index
    %4 = vector.load %arg5[%c0_2, %c0_3] : memref<32x128xf32, #tpu.memory_space<vmem>>, vector<32x128xf32>
    %cst = arith.constant dense<0.000000e+00> : vector<16x128xf32>
    %5 = tpu.matmul %3, %4, %cst {dimension_numbers = #tpu.dot_dimension_numbers<[1], [0], [0], [1], [0, 0, 1, 1], [], []>} : vector<16x32xf32>, vector<32x128xf32>, vector<16x128xf32> -> vector<16x128xf32>
    %c0_4 = arith.constant 0 : index
    %c0_5 = arith.constant 0 : index
    %6 = vector.load %arg6[%c0_4, %c0_5] : memref<1x128xf32, #tpu.memory_space<vmem>>, vector<1x128xf32>
    %7 = vector.broadcast %6 : vector<1x128xf32> to vector<16x128xf32>
    %8 = arith.addf %5, %7 : vector<16x128xf32>
    %cst_6 = arith.constant 5.000000e-01 : f32
    %9 = vector.broadcast %cst_6 : f32 to vector<16x128xf32>
    %10 = arith.mulf %9, %8 : vector<16x128xf32>
    %cst_7 = arith.constant 0.707106769 : f32
    %11 = vector.broadcast %cst_7 : f32 to vector<16x128xf32>
    %12 = arith.mulf %8, %11 : vector<16x128xf32>
    %13 = math.erf %12 : vector<16x128xf32>
    %cst_8 = arith.constant 1.000000e+00 : f32
    %14 = vector.broadcast %cst_8 : f32 to vector<16x128xf32>
    %15 = arith.addf %14, %13 : vector<16x128xf32>
    %16 = arith.mulf %10, %15 : vector<16x128xf32>
    %c0_9 = arith.constant 0 : index
    %c0_10 = arith.constant 0 : index
    %17 = vector.load %arg7[%c0_9, %c0_10] : memref<128x32xf32, #tpu.memory_space<vmem>>, vector<128x32xf32>
    %c0_11 = arith.constant 0 : index
    %c0_12 = arith.constant 0 : index
    %18 = vector.load %arg10[%c0_11, %c0_12] : memref<16x32xf32, #tpu.memory_space<vmem>>, vector<16x32xf32>
    %cst_13 = arith.constant dense<0.000000e+00> : vector<16x32xf32>
    %19 = tpu.matmul %16, %17, %cst_13 {dimension_numbers = #tpu.dot_dimension_numbers<[1], [0], [0], [1], [0, 0, 1, 1], [], []>} : vector<16x128xf32>, vector<128x32xf32>, vector<16x32xf32> -> vector<16x32xf32>
    %20 = arith.addf %18, %19 : vector<16x32xf32>
    %c0_14 = arith.constant 0 : index
    %c0_15 = arith.constant 0 : index
    %21 = vector.load %arg10[%c0_14, %c0_15] : memref<16x32xf32, #tpu.memory_space<vmem>>, vector<16x32xf32>
    tpu.vector_store %arg10[%c0_14, %c0_15], %20 {strides = array<i32>} : memref<16x32xf32, #tpu.memory_space<vmem>>, vector<16x32xf32>,
    %c0_i32_16 = arith.constant 0 : i32
    %22 = arith.cmpi eq, %arg1, %c0_i32_16 : i32
    %23 = arith.extui %22 : i1 to i32
    %c0_i32_17 = arith.constant 0 : i32
    %24 = arith.cmpi ne, %23, %c0_i32_17 : i32
    scf.if %24 {
      %c0_18 = arith.constant 0 : index
      %c0_19 = arith.constant 0 : index
      %25 = vector.load %arg10[%c0_18, %c0_19] : memref<16x32xf32, #tpu.memory_space<vmem>>, vector<16x32xf32>
      %c0_20 = arith.constant 0 : index
      %c0_21 = arith.constant 0 : index
      %26 = vector.load %arg8[%c0_20, %c0_21] : memref<1x32xf32, #tpu.memory_space<vmem>>, vector<1x32xf32>
      %27 = vector.broadcast %26 : vector<1x32xf32> to vector<16x32xf32>
      %28 = arith.addf %25, %27 : vector<16x32xf32>
      %c0_22 = arith.constant 0 : index
      %c0_23 = arith.constant 0 : index
      %29 = vector.load %arg2[%c0_22, %c0_23] : memref<16x32xf32, #tpu.memory_space<vmem>>, vector<16x32xf32>
      %30 = arith.addf %29, %28 : vector<16x32xf32>
      %c0_24 = arith.constant 0 : index
      %c0_25 = arith.constant 0 : index
      %31 = vector.load %arg9[%c0_24, %c0_25] : memref<16x32xf32, #tpu.memory_space<vmem>>, vector<16x32xf32>
      tpu.vector_store %arg9[%c0_24, %c0_25], %30 {strides = array<i32>} : memref<16x32xf32, #tpu.memory_space<vmem>>, vector<16x32xf32>,
    } else {
    }
    return
  }
  func.func @transform_0(%arg0: i32, %arg1: i32) -> (i32, i32) {
    %c0_i32 = arith.constant 0 : i32
    %c0_i32_0 = arith.constant 0 : i32
    return %arg0, %c0_i32 : i32, i32
  }
  func.func @transform_1(%arg0: i32, %arg1: i32) -> (i32, i32) {
    %c0_i32 = arith.constant 0 : i32
    %c0_i32_0 = arith.constant 0 : i32
    %c0_i32_1 = arith.constant 0 : i32
    return %c0_i32, %c0_i32_0 : i32, i32
  }
  func.func @transform_2(%arg0: i32, %arg1: i32) -> (i32, i32) {
    %c0_i32 = arith.constant 0 : i32
    %c0_i32_0 = arith.constant 0 : i32
    %c0_i32_1 = arith.constant 0 : i32
    return %c0_i32, %c0_i32_0 : i32, i32
  }
  func.func @transform_3(%arg0: i32, %arg1: i32) -> (i32, i32) {
    %c0_i32 = arith.constant 0 : i32
    %c0_i32_0 = arith.constant 0 : i32
    return %c0_i32, %arg1 : i32, i32
  }
  func.func @transform_4(%arg0: i32, %arg1: i32) -> (i32, i32) {
    %c0_i32 = arith.constant 0 : i32
    %c0_i32_0 = arith.constant 0 : i32
    return %c0_i32, %arg1 : i32, i32
  }
  func.func @transform_5(%arg0: i32, %arg1: i32) -> (i32, i32) {
    %c0_i32 = arith.constant 0 : i32
    %c0_i32_0 = arith.constant 0 : i32
    return %arg1, %c0_i32 : i32, i32
  }
  func.func @transform_6(%arg0: i32, %arg1: i32) -> (i32, i32) {
    %c0_i32 = arith.constant 0 : i32
    %c0_i32_0 = arith.constant 0 : i32
    %c0_i32_1 = arith.constant 0 : i32
    return %c0_i32, %c0_i32_0 : i32, i32
  }
  func.func @transform_7(%arg0: i32, %arg1: i32) -> (i32, i32) {
    %c0_i32 = arith.constant 0 : i32
    %c0_i32_0 = arith.constant 0 : i32
    return %arg0, %c0_i32 : i32, i32
  }
}

</mosaic_0001>

<llo_original>
// kernel: tpu_custom_call.1
$region0: #{tpu_custom_call.1}
  #allocation0 [shape = 'u32[]', space=smem, size = 0x4, offset = 0x4, fixed_abs, tag = 'smem constant byte address 0x4 - core index']
  #allocation1 [shape = 'u32[144,128]{1,0:T(1,128)}', space=vmem, size = 0x12000, scoped, tag = 'internal scratch']
  #allocation2 [shape = 'f32[16,32]{1,0:T(8,128)}', space=vmem, size = 0x2000, scoped, tag = 'scratch operand']
  #allocation3 [shape = 'f32[16,32]{1,0:T(8,128)}', space=vmem, size = 0x2000, scoped, tag = 'scratch operand']
  %s0 = inlined_call_operand.vmem [shape: f32[16,32], index: 0, kind: input, shape index: {}]
  %s1 = inlined_call_operand.vmem [shape: f32[1,32], index: 1, kind: input, shape index: {}]
  %s2 = inlined_call_operand.vmem [shape: f32[1,32], index: 2, kind: input, shape index: {}]
  %s3 = inlined_call_operand.vmem [shape: f32[32,128], index: 3, kind: input, shape index: {}]
  %s4 = inlined_call_operand.vmem [shape: f32[1,128], index: 4, kind: input, shape index: {}]
  %s5 = inlined_call_operand.vmem [shape: f32[128,32], index: 5, kind: input, shape index: {}]
  %s6 = inlined_call_operand.vmem [shape: f32[1,32], index: 6, kind: input, shape index: {}]
  %s7 = inlined_call_operand.hbm [shape: f32[16,32], index: 7, kind: output, shape index: {}]
  %s8 = sld [smem:[#allocation0]]
  $region46: #{tpu_custom_call.1} parent=0
    _
  %s10 = ssub.s32 1, %s8
  %s11 = scalar_select 0, %s10, %s8
  $region1: #{tpu_custom_call.1} parent=0
    #allocation4 [shape = 'u8[8192]{0}', space=vmem, size = 0x2000, scoped, tag = 'output window, operand 0, single buffered']
    #allocation5 [shape = 's32[1]{0}', space=sflag, size = 0x4, scoped, tag = 'scoped memory for tpu_custom_call.1']
    %12 = vsyncpa [#allocation5], 0
    // Predicated region
    $region2: #{tpu_custom_call.1} parent=1 // pred_check
      _
    $region3: #{tpu_custom_call.1} parent=1 // pred_check_branch
      %14 = sbr.rel (0) target = $region5
    $region4: #{tpu_custom_call.1} parent=1 // pred_region
      _
    $region5: #{tpu_custom_call.1} parent=1 // pred_fallthru
      _
    // Predicated region
    $region6: #{tpu_custom_call.1} parent=1 // pred_check
      _
    $region7: #{tpu_custom_call.1} parent=1 // pred_check_branch
      %16 = sbr.rel (0) target = $region9
    $region8: #{tpu_custom_call.1} parent=1 // pred_region
      _
    $region9: #{tpu_custom_call.1} parent=1 // pred_fallthru
      _
    // Predicated region
    $region10: #{tpu_custom_call.1} parent=1 // pred_check
      _
    $region11: #{tpu_custom_call.1} parent=1 // pred_check_branch
      %18 = sbr.rel (0) target = $region13
    $region12: #{tpu_custom_call.1} parent=1 // pred_region
      _
    $region13: #{tpu_custom_call.1} parent=1 // pred_fallthru
      _
    // Predicated region
    $region14: #{tpu_custom_call.1} parent=1 // pred_check
      _
    $region15: #{tpu_custom_call.1} parent=1 // pred_check_branch
      %20 = sbr.rel (0) target = $region17
    $region16: #{tpu_custom_call.1} parent=1 // pred_region
      _
    $region17: #{tpu_custom_call.1} parent=1 // pred_fallthru
      _
    // Predicated region
    $region18: #{tpu_custom_call.1} parent=1 // pred_check
      _
    $region19: #{tpu_custom_call.1} parent=1 // pred_check_branch
      %22 = sbr.rel (0) target = $region21
    $region20: #{tpu_custom_call.1} parent=1 // pred_region
      _
    $region21: #{tpu_custom_call.1} parent=1 // pred_fallthru
      _
    // Predicated region
    $region22: #{tpu_custom_call.1} parent=1 // pred_check
      _
    $region23: #{tpu_custom_call.1} parent=1 // pred_check_branch
      %24 = sbr.rel (0) target = $region25
    $region24: #{tpu_custom_call.1} parent=1 // pred_region
      _
    $region25: #{tpu_custom_call.1} parent=1 // pred_fallthru
      _
    // Predicated region
    $region26: #{tpu_custom_call.1} parent=1 // pred_check
      _
    $region27: #{tpu_custom_call.1} parent=1 // pred_check_branch
      %26 = sbr.rel (0) target = $region29
    $region28: #{tpu_custom_call.1} parent=1 // pred_region
      _
    $region29: #{tpu_custom_call.1} parent=1 // pred_fallthru
      _
    %p27 = scmp.eq.s32.totalorder 0, 0
    // Predicated region
    $region30: #{tpu_custom_call.1} parent=1 // pred_check
      %p28 = pneg %p27
    $region31: #{tpu_custom_call.1} parent=1 // pred_check_branch
      %30 = sbr.rel (%p28) target = $region33
    $region32: #{tpu_custom_call.1} parent=1 // pred_region
      %v31 = vld [vmem:[%s0] sm:$0xff]
      %v32 = vld [vmem:[%s0 + $0x8] sm:$0xff]
      %vm33 = vcmask 261120
      %v34 = vsel %vm33, %v31, 0.0
      %35 = vadd.xlane.f32.xlu0 %v34
      %v36 = vpop.xlane.xlu0 %35
      %v37 = vsel %vm33, %v32, 0.0
      %38 = vadd.xlane.f32.xlu0 %v37
      %v39 = vpop.xlane.xlu0 %38
      %v40 = vrcp.pop 32.0
      %v41 = vmul.f32 %v36, %v40
      %v42 = vmul.f32 %v39, %v40
      %v43 = vsub.f32 %v31, %v41
      %v44 = vsub.f32 %v32, %v42
      %v45 = vmul.f32 %v43, %v43
      %v46 = vmul.f32 %v44, %v44
      %v47 = vsel %vm33, %v45, 0.0
      %48 = vadd.xlane.f32.xlu0 %v47
      %v49 = vpop.xlane.xlu0 %48
      %v50 = vsel %vm33, %v46, 0.0
      %51 = vadd.xlane.f32.xlu0 %v50
      %v52 = vpop.xlane.xlu0 %51
      %v53 = vmul.f32 %v49, %v40
      %v54 = vmul.f32 %v52, %v40
      %v55 = vadd.f32 %v53, 1e-05
      %v56 = vadd.f32 %v54, 1e-05
      %v57 = vrsqrt.pop %v55
      %v58 = vrsqrt.pop %v56
      %v59 = vmul.f32 %v43, %v57
      %v60 = vmul.f32 %v44, %v58
      %v61 = vld [vmem:[%s1] sm:$0x1]
      %v63 = vlaneseq
      %v64 = vshrl.u32 %v63, 7
      %v65 = vsub.s32 0, %v64
      %v66 = vrot.slane %v61, %v65
      %v68 = vmul.f32 %v59, %v66
      %v69 = vmul.f32 %v60, %v66
      %v70 = vld [vmem:[%s2] sm:$0x1]
      %v72 = vlaneseq
      %v73 = vshrl.u32 %v72, 7
      %v74 = vsub.s32 0, %v73
      %v75 = vrot.slane %v70, %v74
      %v77 = vadd.f32 %v68, %v75
      %v78 = vadd.f32 %v69, %v75
      %79 = vst.msk [vmem:[#allocation3] sm:$0xff] %vm33, %v77
      %80 = vst.msk [vmem:[#allocation3 + $0x8] sm:$0xff] %vm33, %v78
      %81 = vst.msk [vmem:[#allocation2] sm:$0xff] %vm33, 0.0
      %82 = vst.msk [vmem:[#allocation2 + $0x8] sm:$0xff] %vm33, 0.0
    $region33: #{tpu_custom_call.1} parent=1 // pred_fallthru
      _
    %v83 = vld [vmem:[#allocation3] sm:$0xff]
    %v84 = vld [vmem:[#allocation3 + $0x8] sm:$0xff]
    %v85 = vld [vmem:[%s3] sm:$0xff]
    %v86 = vld [vmem:[%s3 + $0x8] sm:$0xff]
    %v87 = vld [vmem:[%s3 + $0x10] sm:$0xff]
    %v88 = vld [vmem:[%s3 + $0x18] sm:$0xff]
    %v89 = vld [vmem:[%s4] sm:$0x1]
    %v91 = vlaneseq
    %v92 = vshrl.u32 %v91, 7
    %v93 = vsub.s32 0, %v92
    %v94 = vrot.slane %v89, %v93
    %vm96 = vcmask 261120
    %v98 = vsel %vm96, %v83, 0
    %v101 = vsel %vm96, %v84, 0
    %103 = vmatprep.subr.mxu0 0.0
    %104 = vmatpush1.msra.mxu0 %v85
    %105 = vmatprep.subr.mxu0 0.0
    %106 = vmatpush1.msra.mxu0 %v86
    %107 = vmatprep.subr.mxu0 0.0
    %108 = vmatpush1.msra.mxu0 %v87
    %109 = vmatprep.subr.mxu0 0.0
    %110 = vmatpush1.msra.mxu0 %v88
    %111 = vmatprep.subr.mxu0 0.0
    %112 = vmatpush1.msra.mxu0 0.0
    %113 = vmatprep.subr.mxu0 0.0
    %114 = vmatpush1.msra.mxu0 0.0
    %115 = vmatprep.subr.mxu0 0.0
    %116 = vmatpush1.msra.mxu0 0.0
    %117 = vmatprep.subr.mxu0 0.0
    %118 = vmatpush1.msra.mxu0 0.0
    %119 = vmatprep.subr.mxu0 0.0
    %120 = vmatpush1.msra.mxu0 0.0
    %121 = vmatprep.subr.mxu0 0.0
    %122 = vmatpush1.msra.mxu0 0.0
    %123 = vmatprep.subr.mxu0 0.0
    %124 = vmatpush1.msra.mxu0 0.0
    %125 = vmatprep.subr.mxu0 0.0
    %126 = vmatpush1.msra.mxu0 0.0
    %127 = vmatprep.subr.mxu0 0.0
    %128 = vmatpush1.msra.mxu0 0.0
    %129 = vmatprep.subr.mxu0 0.0
    %130 = vmatpush1.msra.mxu0 0.0
    %131 = vmatprep.subr.mxu0 0.0
    %132 = vmatpush1.msra.mxu0 0.0
    %133 = vmatprep.subr.mxu0 0.0
    %134 = vmatpush1.msra.mxu0 0.0
    %135 = vmatprep.subr.mxu0 0.0
    %136 = vmatpush1.msra.mxu0 0.0
    %137 = vmatprep.subr.mxu0 0.0
    %138 = vmatpush1.msra.mxu0 0.0
    %139 = vmatprep.subr.mxu0 0.0
    %140 = vmatpush1.msra.mxu0 0.0
    %141 = vmatprep.subr.mxu0 0.0
    %142 = vmatpush1.msra.mxu0 0.0
    %143 = vmatprep.subr.mxu0 0.0
    %144 = vmatpush1.msra.mxu0 0.0
    %145 = vmatprep.subr.mxu0 0.0
    %146 = vmatpush1.msra.mxu0 0.0
    %147 = vmatprep.subr.mxu0 0.0
    %148 = vmatpush1.msra.mxu0 0.0
    %149 = vmatprep.subr.mxu0 0.0
    %150 = vmatpush1.msra.mxu0 0.0
    %151 = vmatprep.subr.mxu0 0.0
    %152 = vmatpush1.msra.mxu0 0.0
    %153 = vmatprep.subr.mxu0 0.0
    %154 = vmatpush1.msra.mxu0 0.0
    %155 = vmatprep.subr.mxu0 0.0
    %156 = vmatpush1.msra.mxu0 0.0
    %157 = vmatprep.subr.mxu0 0.0
    %158 = vmatpush1.msra.mxu0 0.0
    %159 = vmatprep.subr.mxu0 0.0
    %160 = vmatpush1.msra.mxu0 0.0
    %161 = vmatprep.subr.mxu0 0.0
    %162 = vmatpush1.msra.mxu0 0.0
    %163 = vmatprep.subr.mxu0 0.0
    %164 = vmatpush1.msra.mxu0 0.0
    %165 = vmatprep.subr.mxu0 0.0
    %166 = vmatpush1.msra.mxu0 0.0
    %167 = vmatprep.mubr.f32.mxu0 0.0
    %168 = vmatmul.mubr.f32.gmra.mrb[0].mxu0 %v98
    %v169 = vpop.f32.mrb[0].mxu0
    %v170 = vadd.f32 %v94, %v169
    %v171 = vpop.f32.mrb[0].mxu0
    %172 = vmatprep.mubr.f32.mxu0 0.0
    %173 = vmatmul.mubr.f32.gmra.mrb[0].mxu0 %v101
    %v174 = vpop.f32.mrb[0].mxu0
    %v175 = vadd.f32 %v94, %v174
    %v176 = vpop.f32.mrb[0].mxu0
    %177 = vdwg.mxu0
    %v178 = vmul.f32 %v170, 0.5
    %v179 = vmul.f32 %v175, 0.5
    %v180 = vmul.f32 %v170, 0.70710677
    %v181 = vmul.f32 %v175, 0.70710677
    %v182 = verf.f32.pop %v180
    %v183 = verf.f32.pop %v181
    %v184 = vadd.f32 %v182, 1.0
    %v185 = vadd.f32 %v183, 1.0
    %v186 = vmul.f32 %v178, %v184
    %v187 = vmul.f32 %v179, %v185
    %v188 = vld [vmem:[%s5] sm:$0xff]
    %v189 = vld [vmem:[%s5 + $0x8] sm:$0xff]
    %v190 = vld [vmem:[%s5 + $0x10] sm:$0xff]
    %v191 = vld [vmem:[%s5 + $0x18] sm:$0xff]
    %v192 = vld [vmem:[%s5 + $0x20] sm:$0xff]
    %v193 = vld [vmem:[%s5 + $0x28] sm:$0xff]
    %v194 = vld [vmem:[%s5 + $0x30] sm:$0xff]
    %v195 = vld [vmem:[%s5 + $0x38] sm:$0xff]
    %v196 = vld [vmem:[%s5 + $0x40] sm:$0xff]
    %v197 = vld [vmem:[%s5 + $0x48] sm:$0xff]
    %v198 = vld [vmem:[%s5 + $0x50] sm:$0xff]
    %v199 = vld [vmem:[%s5 + $0x58] sm:$0xff]
    %v200 = vld [vmem:[%s5 + $0x60] sm:$0xff]
    %v201 = vld [vmem:[%s5 + $0x68] sm:$0xff]
    %v202 = vld [vmem:[%s5 + $0x70] sm:$0xff]
    %v203 = vld [vmem:[%s5 + $0x78] sm:$0xff]
    %v204 = vld [vmem:[#allocation2] sm:$0xff]
    %v205 = vld [vmem:[#allocation2 + $0x8] sm:$0xff]
    %206 = vmatprep.subr.mxu0 0.0
    %207 = vmatpush1.msra.mxu0 %v188
    %208 = vmatprep.subr.mxu0 0.0
    %209 = vmatpush1.msra.mxu0 %v189
    %210 = vmatprep.subr.mxu0 0.0
    %211 = vmatpush1.msra.mxu0 %v190
    %212 = vmatprep.subr.mxu0 0.0
    %213 = vmatpush1.msra.mxu0 %v191
    %214 = vmatprep.subr.mxu0 0.0
    %215 = vmatpush1.msra.mxu0 %v192
    %216 = vmatprep.subr.mxu0 0.0
    %217 = vmatpush1.msra.mxu0 %v193
    %218 = vmatprep.subr.mxu0 0.0
    %219 = vmatpush1.msra.mxu0 %v194
    %220 = vmatprep.subr.mxu0 0.0
    %221 = vmatpush1.msra.mxu0 %v195
    %222 = vmatprep.subr.mxu0 0.0
    %223 = vmatpush1.msra.mxu0 %v196
    %224 = vmatprep.subr.mxu0 0.0
    %225 = vmatpush1.msra.mxu0 %v197
    %226 = vmatprep.subr.mxu0 0.0
    %227 = vmatpush1.msra.mxu0 %v198
    %228 = vmatprep.subr.mxu0 0.0
    %229 = vmatpush1.msra.mxu0 %v199
    %230 = vmatprep.subr.mxu0 0.0
    %231 = vmatpush1.msra.mxu0 %v200
    %232 = vmatprep.subr.mxu0 0.0
    %233 = vmatpush1.msra.mxu0 %v201
    %234 = vmatprep.subr.mxu0 0.0
    %235 = vmatpush1.msra.mxu0 %v202
    %236 = vmatprep.subr.mxu0 0.0
    %237 = vmatpush1.msra.mxu0 %v203
    %238 = vmatprep.subr.mxu0 0.0
    %239 = vmatpush1.msra.mxu0 0.0
    %240 = vmatprep.subr.mxu0 0.0
    %241 = vmatpush1.msra.mxu0 0.0
    %242 = vmatprep.subr.mxu0 0.0
    %243 = vmatpush1.msra.mxu0 0.0
    %244 = vmatprep.subr.mxu0 0.0
    %245 = vmatpush1.msra.mxu0 0.0
    %246 = vmatprep.subr.mxu0 0.0
    %247 = vmatpush1.msra.mxu0 0.0
    %248 = vmatprep.subr.mxu0 0.0
    %249 = vmatpush1.msra.mxu0 0.0
    %250 = vmatprep.subr.mxu0 0.0
    %251 = vmatpush1.msra.mxu0 0.0
    %252 = vmatprep.subr.mxu0 0.0
    %253 = vmatpush1.msra.mxu0 0.0
    %254 = vmatprep.subr.mxu0 0.0
    %255 = vmatpush1.msra.mxu0 0.0
    %256 = vmatprep.subr.mxu0 0.0
    %257 = vmatpush1.msra.mxu0 0.0
    %258 = vmatprep.subr.mxu0 0.0
    %259 = vmatpush1.msra.mxu0 0.0
    %260 = vmatprep.subr.mxu0 0.0
    %261 = vmatpush1.msra.mxu0 0.0
    %262 = vmatprep.subr.mxu0 0.0
    %263 = vmatpush1.msra.mxu0 0.0
    %264 = vmatprep.subr.mxu0 0.0
    %265 = vmatpush1.msra.mxu0 0.0
    %266 = vmatprep.subr.mxu0 0.0
    %267 = vmatpush1.msra.mxu0 0.0
    %268 = vmatprep.subr.mxu0 0.0
    %269 = vmatpush1.msra.mxu0 0.0
    %270 = vmatprep.mubr.f32.mxu0 0.0
    %271 = vmatmul.mubr.f32.gmra.mrb[0].mxu0 %v186
    %v272 = vpop.f32.mrb[0].mxu0
    %v273 = vadd.f32 0.0, %v272
    %v274 = vpop.f32.mrb[0].mxu0
    %275 = vmatprep.mubr.f32.mxu0 0.0
    %276 = vmatmul.mubr.f32.gmra.mrb[0].mxu0 %v187
    %v277 = vpop.f32.mrb[0].mxu0
    %v278 = vadd.f32 0.0, %v277
    %v279 = vpop.f32.mrb[0].mxu0
    %280 = vdwg.mxu0
    %v281 = vadd.f32 %v204, %v273
    %v282 = vadd.f32 %v205, %v278
    %283 = vst.msk [vmem:[#allocation2] sm:$0xff] %vm96, %v281
    %284 = vst.msk [vmem:[#allocation2 + $0x8] sm:$0xff] %vm96, %v282
    // Predicated region
    $region34: #{tpu_custom_call.1} parent=1 // pred_check
      %p285 = pneg %p27
    $region35: #{tpu_custom_call.1} parent=1 // pred_check_branch
      %287 = sbr.rel (%p285) target = $region37
    $region36: #{tpu_custom_call.1} parent=1 // pred_region
      %v288 = vld [vmem:[#allocation2] sm:$0xff]
      %v289 = vld [vmem:[#allocation2 + $0x8] sm:$0xff]
      %v290 = vld [vmem:[%s6] sm:$0x1]
      %v292 = vlaneseq
      %v293 = vshrl.u32 %v292, 7
      %v294 = vsub.s32 0, %v293
      %v295 = vrot.slane %v290, %v294
      %v297 = vadd.f32 %v288, %v295
      %v298 = vadd.f32 %v289, %v295
      %v299 = vld [vmem:[%s0] sm:$0xff]
      %v300 = vld [vmem:[%s0 + $0x8] sm:$0xff]
      %v301 = vadd.f32 %v299, %v297
      %v302 = vadd.f32 %v300, %v298
      %303 = vst.msk [vmem:[#allocation4] sm:$0xff] %vm96, %v301
      %304 = vst.msk [vmem:[#allocation4 + $0x8] sm:$0xff] %vm96, %v302
    $region37: #{tpu_custom_call.1} parent=1 // pred_fallthru
      _
    // Predicated region
    $region38: #{tpu_custom_call.1} parent=1 // pred_check
      _
    $region39: #{tpu_custom_call.1} parent=1 // pred_check_branch
      %306 = sbr.rel (0) target = $region41
    $region40: #{tpu_custom_call.1} parent=1 // pred_region
      %s308 = ssub.s32 256, 256
      %309 = vsyncadd [#allocation5], %s308
      %s310 = sshll.u32 [#allocation4], 4
      %s311 = int_to_ptr.vmem [resolvable:$true] %s310
      %316 = dma.vmem_to_hbm [thread:$0]  %s311, 256, %s7, [#allocation5], 128, 128, 8
    $region41: #{tpu_custom_call.1} parent=1 // pred_fallthru
      _
    // Predicated region
    $region42: #{tpu_custom_call.1} parent=1 // pred_check
      _
    $region43: #{tpu_custom_call.1} parent=1 // pred_check_branch
      %318 = sbr.rel (0) target = $region45
    $region44: #{tpu_custom_call.1} parent=1 // pred_region
      %319 = dma.done [#allocation5], 256
    $region45: #{tpu_custom_call.1} parent=1 // pred_fallthru
      _
    %320 = vsyncpa [#allocation5], 1

</llo_original>
